<compile_context>
chip_gen: v7x
topology: tpu7x:2x2x1
jax: 0.10.0
libtpu: 0.0.40
codegen_flags: <defaults>
</compile_context>

<pallas_src>
import functools

import jax
import jax.numpy as jnp
from jax.experimental import pallas as pl
from jax.experimental.pallas import tpu as pltpu

_LANES = 128
_SUBLANES = 8
_BLOCK_BYTES = 4 << 20     # per-input block byte budget (Pallas double-buffers it)
_MAX_BLOCK_ROWS = 8192     # caps the per-block f32 working set at 4 MiB


def _pick_acc_rows(block_rows):
    for cand in (256, 64, 8):
        if block_rows % cand == 0:
            return cand
    return block_rows


@functools.lru_cache(maxsize=1)
def _multi_tensorcore_chip():
    """True only when the chip has >1 TensorCore (v7x). Best effort, never raises."""
    try:
        kind = jax.devices()[0].device_kind.lower()
    except Exception:
        return False
    return ("v7" in kind) or ("7x" in kind)


def _rmspe_partial_kernel(yp_ref, yt_ref, o_ref, acc_ref, *, eps, rows_total,
                          block_rows, blocks_per_core, acc_rows, has_partial):
    j = pl.program_id(1)

    @pl.when(j == 0)
    def _init():
        acc_ref[...] = jnp.zeros_like(acc_ref)

    # Cast on load (inputs may arrive bf16/f16); all math in f32.
    yp = yp_ref[...].astype(jnp.float32)
    yt = yt_ref[...].astype(jnp.float32)
    eps_f = jnp.float32(eps)

    def accumulate(sq):
        if acc_rows == block_rows:
            acc_ref[...] += sq
        else:
            # (block_rows,128) -> (block_rows//acc_rows, acc_rows, 128); summing the
            # leading axis is plain vreg adds (no cross-lane movement) and keeps the
            # accumulator read-modify-write traffic at acc-size, not block-size.
            acc_ref[...] += sq.reshape(-1, acc_rows, _LANES).sum(axis=0)

    if has_partial:
        # Scalar count of valid rows left in this logical block (<= 0 for a
        # clamped duplicate block on the 2-core split).
        blk = pl.program_id(0) * blocks_per_core + j
        rows_left = rows_total - blk * block_rows

        @pl.when(rows_left >= block_rows)
        def _full_block():
            r = (yp - yt) / (yt + eps_f)
            accumulate(r * r)

        @pl.when(rows_left < block_rows)
        def _tail_block():
            row_ids = jax.lax.broadcasted_iota(jnp.int32, (block_rows, _LANES), 0)
            mask = row_ids < rows_left
            yt_safe = jnp.where(mask, yt, jnp.float32(1.0))   # no 0/0 even pre-mask
            r = (yp - yt_safe) / (yt_safe + eps_f)
            accumulate(jnp.where(mask, r * r, jnp.float32(0.0)))
    else:
        r = (yp - yt) / (yt + eps_f)
        accumulate(r * r)

    @pl.when(j == pl.num_programs(1) - 1)
    def _finalize():
        # Sublane-only reduce to a lane-dense (1,128) per-core partial; the
        # 128-lane and per-core sums happen in the wrapper epilogue.
        o_ref[...] = jnp.sum(acc_ref[...], axis=0, keepdims=True)


def rmspe_loss(ypred, ytrue, eps=0.0):
    """RMSPE loss via a Pallas TPU streaming reduction. Returns a scalar f32."""
    assert ypred.shape == ytrue.shape, "ypred/ytrue must have the same shape"
    n = int(ypred.size)
    if n == 0:
        return jnp.float32(jnp.nan)   # matches torch mean over an empty tensor

    yp = jnp.ravel(ypred)
    yt = jnp.ravel(ytrue)

    rows = n // _LANES
    tail = n - rows * _LANES

    # Ragged tail (< 128 elements): handled in the wrapper epilogue instead of
    # materializing padded copies of both inputs.
    tail_sq = jnp.float32(0.0)
    if tail:
        tp = jax.lax.slice(yp, (rows * _LANES,), (n,)).astype(jnp.float32)
        tt = jax.lax.slice(yt, (rows * _LANES,), (n,)).astype(jnp.float32)
        rt = (tp - tt) / (tt + jnp.float32(eps))
        tail_sq = jnp.sum(rt * rt)

    if rows == 0:
        return jnp.sqrt(tail_sq / jnp.float32(n))

    if tail:
        # NOTE: only non-128-multiple sizes pay this one prefix copy; the common
        # case below is a free row-major reshape (no HBM round trip).
        yp_main = jax.lax.slice(yp, (0,), (rows * _LANES,))
        yt_main = jax.lax.slice(yt, (0,), (rows * _LANES,))
    else:
        yp_main, yt_main = yp, yt
    yp2 = yp_main.reshape(rows, _LANES)
    yt2 = yt_main.reshape(rows, _LANES)

    itemsize_p = jnp.dtype(yp2.dtype).itemsize
    itemsize_t = jnp.dtype(yt2.dtype).itemsize
    budget_rows = _BLOCK_BYTES // (_LANES * max(itemsize_p, itemsize_t))
    budget_rows = max(_SUBLANES, (budget_rows // _SUBLANES) * _SUBLANES)
    block_rows = min(rows, budget_rows, _MAX_BLOCK_ROWS)
    acc_rows = _pick_acc_rows(block_rows)
    num_blocks = -(-rows // block_rows)

    in_block_bytes = block_rows * _LANES * (itemsize_p + itemsize_t)
    f32_block_bytes = block_rows * _LANES * 4
    vmem_limit_bytes = int(min(max(2 * in_block_bytes + 4 * f32_block_bytes + (4 << 20),
                                   16 << 20),
                               48 << 20))

    def _launch(ncores):
        blocks_per_core = -(-num_blocks // ncores)
        # Masking is needed iff the grid covers more rows than exist (partial
        # final block, or a clamped duplicate block on the 2-core split).
        has_partial = (ncores * blocks_per_core * block_rows) != rows
        core_sem = getattr(pltpu, "CORE_PARALLEL", "parallel") if ncores > 1 else "arbitrary"

        def in_map(p, j):
            # Clamp so over-provisioned blocks never index out of range; any
            # duplicate data they read is zeroed by the in-kernel row mask.
            return (jnp.minimum(p * blocks_per_core + j, num_blocks - 1), 0)

        kernel = functools.partial(
            _rmspe_partial_kernel,
            eps=float(eps), rows_total=rows, block_rows=block_rows,
            blocks_per_core=blocks_per_core, acc_rows=acc_rows,
            has_partial=has_partial)

        return pl.pallas_call(
            kernel,
            out_shape=jax.ShapeDtypeStruct((ncores, _LANES), jnp.float32),
            grid_spec=pltpu.PrefetchScalarGridSpec(
                num_scalar_prefetch=0,
                grid=(ncores, blocks_per_core),
                in_specs=[
                    pl.BlockSpec((block_rows, _LANES), in_map),
                    pl.BlockSpec((block_rows, _LANES), in_map),
                ],
                out_specs=pl.BlockSpec((1, _LANES), lambda p, j: (p, 0)),
                scratch_shapes=[pltpu.VMEM((acc_rows, _LANES), jnp.float32)],
            ),
            compiler_params=pltpu.CompilerParams(
                dimension_semantics=(core_sem, "arbitrary"),
                vmem_limit_bytes=vmem_limit_bytes,
            ),
        )(yp2, yt2)

    if _multi_tensorcore_chip() and num_blocks >= 2:
        try:
            partials = _launch(2)
        except Exception:   # conservative fallback if CORE_PARALLEL is rejected
            partials = _launch(1)
    else:
        partials = _launch(1)

    total = jnp.sum(partials) + tail_sq
    return jnp.sqrt(total / jnp.float32(n))


def _rmspe_ref(ypred, ytrue, eps=0.0):
    ypred = ypred.astype(jnp.float32)
    ytrue = ytrue.astype(jnp.float32)
    return jnp.sqrt(jnp.mean(jnp.square((ypred - ytrue) / (ytrue + eps))))


def _check(shape, dtype, key, eps=0.0, rtol=2e-5, atol=1e-6):
    k1, k2 = jax.random.split(key)
    ytrue = jax.random.uniform(k1, shape, jnp.float32, minval=0.5, maxval=2.0)
    ypred = ytrue + 0.1 * jax.random.normal(k2, shape, jnp.float32)
    ytrue = ytrue.astype(dtype)
    ypred = ypred.astype(dtype)

    loss = jax.block_until_ready(rmspe_loss(ypred, ytrue, eps=eps))
    ref = jax.block_until_ready(_rmspe_ref(ypred, ytrue, eps=eps))
    assert jnp.allclose(loss, ref, rtol=rtol, atol=atol), (shape, dtype, loss, ref)


if __name__ == "__main__":
    key = jax.random.PRNGKey(0)
    keys = jax.random.split(key, 4)

    # Primary NCHW-shaped example, matching how the PyTorch loss would be fed.
    _check((2, 4, 16, 16), jnp.float32, keys[0])
    # Ragged size -> exercises the wrapper-tail epilogue (no jnp.pad path).
    _check((3, 5, 7, 11), jnp.float32, keys[1])
    # bf16 input -> exercises in-kernel upcast and the per-dtype block budget.
    _check((8, 16, 64, 64), jnp.bfloat16, keys[2], rtol=1e-4)
    # Multi-block grid with a partial final block -> exercises the pl.when-gated mask.
    _check((8, 1200, 128), jnp.float32, keys[3], rtol=1e-4)

    print("KERNEL_OK")
</pallas_src>

<mosaic_0001>
module attributes {stable_mosaic.version = 11 : i64} {
  func.func @_rmspe_partial_kernel(%arg0: i32, %arg1: i32, %arg2: memref<16x128xf32, #tpu.memory_space<vmem>>, %arg3: memref<16x128xf32, #tpu.memory_space<vmem>>, %arg4: memref<1x128xf32, #tpu.memory_space<vmem>>, %arg5: memref<8x128xf32, #tpu.memory_space<vmem>>) attributes {dimension_semantics = [#tpu.dimension_semantics<arbitrary>, #tpu.dimension_semantics<arbitrary>], iteration_bounds = array<i64: 1, 1>, scalar_prefetch = 0 : i64, scratch_operands = 1 : i64, tpu.core_type = #tpu.core_type<tc>, window_params = [{transform_indices = @transform_0, window_bounds = array<i64: 16, 128>}, {transform_indices = @transform_1, window_bounds = array<i64: 16, 128>}, {transform_indices = @transform_2, window_bounds = array<i64: 1, 128>}]} {
    %c0_i32 = arith.constant 0 : i32
    %0 = arith.cmpi eq, %arg1, %c0_i32 : i32
    %1 = arith.extui %0 : i1 to i32
    %c0_i32_0 = arith.constant 0 : i32
    %2 = arith.cmpi ne, %1, %c0_i32_0 : i32
    scf.if %2 {
      %cst_11 = arith.constant 0.000000e+00 : f32
      %18 = vector.broadcast %cst_11 : f32 to vector<8x128xf32>
      %c0_12 = arith.constant 0 : index
      %c0_13 = arith.constant 0 : index
      %19 = vector.load %arg5[%c0_12, %c0_13] : memref<8x128xf32, #tpu.memory_space<vmem>>, vector<8x128xf32>
      tpu.vector_store %arg5[%c0_12, %c0_13], %18 {strides = array<i32>} : memref<8x128xf32, #tpu.memory_space<vmem>>, vector<8x128xf32>,
    } else {
    }
    %c0 = arith.constant 0 : index
    %c0_1 = arith.constant 0 : index
    %3 = vector.load %arg2[%c0, %c0_1] : memref<16x128xf32, #tpu.memory_space<vmem>>, vector<16x128xf32>
    %c0_2 = arith.constant 0 : index
    %c0_3 = arith.constant 0 : index
    %4 = vector.load %arg3[%c0_2, %c0_3] : memref<16x128xf32, #tpu.memory_space<vmem>>, vector<16x128xf32>
    %5 = arith.subf %3, %4 : vector<16x128xf32>
    %cst = arith.constant 0.000000e+00 : f32
    %6 = vector.broadcast %cst : f32 to vector<16x128xf32>
    %7 = arith.addf %4, %6 : vector<16x128xf32>
    %8 = arith.divf %5, %7 : vector<16x128xf32>
    %9 = arith.mulf %8, %8 : vector<16x128xf32>
    %c0_4 = arith.constant 0 : index
    %c0_5 = arith.constant 0 : index
    %10 = vector.load %arg5[%c0_4, %c0_5] : memref<8x128xf32, #tpu.memory_space<vmem>>, vector<8x128xf32>
    %11 = vector.shape_cast %9 : vector<16x128xf32> to vector<2x8x128xf32>
    %cst_6 = arith.constant dense<0.000000e+00> : vector<8x128xf32>
    %12 = vector.multi_reduction <add>, %11, %cst_6 [0] : vector<2x8x128xf32> to vector<8x128xf32>
    %13 = arith.addf %10, %12 : vector<8x128xf32>
    %c0_7 = arith.constant 0 : index
    %c0_8 = arith.constant 0 : index
    %14 = vector.load %arg5[%c0_7, %c0_8] : memref<8x128xf32, #tpu.memory_space<vmem>>, vector<8x128xf32>
    tpu.vector_store %arg5[%c0_7, %c0_8], %13 {strides = array<i32>} : memref<8x128xf32, #tpu.memory_space<vmem>>, vector<8x128xf32>,
    %c0_i32_9 = arith.constant 0 : i32
    %15 = arith.cmpi eq, %arg1, %c0_i32_9 : i32
    %16 = arith.extui %15 : i1 to i32
    %c0_i32_10 = arith.constant 0 : i32
    %17 = arith.cmpi ne, %16, %c0_i32_10 : i32
    scf.if %17 {
      %c0_11 = arith.constant 0 : index
      %c0_12 = arith.constant 0 : index
      %18 = vector.load %arg5[%c0_11, %c0_12] : memref<8x128xf32, #tpu.memory_space<vmem>>, vector<8x128xf32>
      %cst_13 = arith.constant dense<0.000000e+00> : vector<128xf32>
      %19 = vector.multi_reduction <add>, %18, %cst_13 [0] : vector<8x128xf32> to vector<128xf32>
      %20 = vector.shape_cast %19 : vector<128xf32> to vector<1x128xf32>
      %c0_14 = arith.constant 0 : index
      %c0_15 = arith.constant 0 : index
      %21 = vector.load %arg4[%c0_14, %c0_15] : memref<1x128xf32, #tpu.memory_space<vmem>>, vector<1x128xf32>
      tpu.vector_store %arg4[%c0_14, %c0_15], %20 {strides = array<i32>} : memref<1x128xf32, #tpu.memory_space<vmem>>, vector<1x128xf32>,
    } else {
    }
    return
  }
  func.func @transform_0(%arg0: i32, %arg1: i32) -> (i32, i32) {
    %c1_i32 = arith.constant 1 : i32
    %0 = arith.muli %arg0, %c1_i32 : i32
    %1 = arith.addi %0, %arg1 : i32
    %c0_i32 = arith.constant 0 : i32
    %2 = arith.minsi %1, %c0_i32 : i32
    %c0_i32_0 = arith.constant 0 : i32
    %c0_i32_1 = arith.constant 0 : i32
    return %2, %c0_i32_0 : i32, i32
  }
  func.func @transform_1(%arg0: i32, %arg1: i32) -> (i32, i32) {
    %c1_i32 = arith.constant 1 : i32
    %0 = arith.muli %arg0, %c1_i32 : i32
    %1 = arith.addi %0, %arg1 : i32
    %c0_i32 = arith.constant 0 : i32
    %2 = arith.minsi %1, %c0_i32 : i32
    %c0_i32_0 = arith.constant 0 : i32
    %c0_i32_1 = arith.constant 0 : i32
    return %2, %c0_i32_0 : i32, i32
  }
  func.func @transform_2(%arg0: i32, %arg1: i32) -> (i32, i32) {
    %c0_i32 = arith.constant 0 : i32
    %c0_i32_0 = arith.constant 0 : i32
    return %arg0, %c0_i32 : i32, i32
  }
}

</mosaic_0001>

<llo_original>
// kernel: tpu_custom_call.1
$region0: #{tpu_custom_call.1}
  #allocation0 [shape = 'u32[]', space=smem, size = 0x4, offset = 0x4, fixed_abs, tag = 'smem constant byte address 0x4 - core index']
  #allocation1 [shape = 'u32[144,128]{1,0:T(1,128)}', space=vmem, size = 0x12000, scoped, tag = 'internal scratch']
  #allocation2 [shape = 'f32[8,128]{1,0:T(8,128)}', space=vmem, size = 0x1000, scoped, tag = 'scratch operand']
  %s0 = inlined_call_operand.hbm [shape: f32[16,128], index: 0, kind: input, shape index: {}]
  %s1 = inlined_call_operand.hbm [shape: f32[16,128], index: 1, kind: input, shape index: {}]
  %s2 = inlined_call_operand.hbm [shape: f32[1,128], index: 2, kind: output, shape index: {}]
  %s3 = sld [smem:[#allocation0]]
  $region34: #{tpu_custom_call.1} parent=0
    _
  %s5 = ssub.s32 1, %s3
  %s6 = scalar_select 0, %s5, %s3
  $region1: #{tpu_custom_call.1} parent=0
    #allocation3 [shape = 'u8[8192]{0}', space=vmem, size = 0x2000, scoped, tag = 'input window, operand 0, single buffered']
    #allocation4 [shape = 's32[1]{0}', space=sflag, size = 0x4, scoped, tag = 'scoped memory for tpu_custom_call.1']
    #allocation5 [shape = 's32[1]{0}', space=sflag, size = 0x4, scoped, tag = 'scoped memory for tpu_custom_call.1']
    #allocation6 [shape = 'u8[8192]{0}', space=vmem, size = 0x2000, scoped, tag = 'input window, operand 1, single buffered']
    #allocation7 [shape = 's32[1]{0}', space=sflag, size = 0x4, scoped, tag = 'scoped memory for tpu_custom_call.1']
    #allocation8 [shape = 'u8[512]{0}', space=vmem, size = 0x400, scoped, tag = 'output window, operand 0, single buffered']
    %7 = vsyncpa [#allocation4], 0
    %8 = vsyncpa [#allocation7], 0
    %9 = vsyncpa [#allocation5], 0
    // Predicated region
    $region2: #{tpu_custom_call.1} parent=1 // pred_check
      _
    $region3: #{tpu_custom_call.1} parent=1 // pred_check_branch
      %11 = sbr.rel (0) target = $region5
    $region4: #{tpu_custom_call.1} parent=1 // pred_region
      %s12 = sadd.s32 0, 0
      %p13 = scmp.lt.s32.totalorder %s12, 0
      %s14 = scalar_select %p13, %s12, 0
      %s15 = smul.u32 2, %s14
      %s17 = ssub.s32 256, 256
      %18 = vsyncadd [#allocation4], %s17
      %s19 = smul.addr %s15, 128
      %s20 = scalar_lea.hbm %s0, %s19
      %s21 = sshll.u32 [#allocation3], 4
      %s22 = int_to_ptr.vmem [resolvable:$true] %s21
      %27 = dma.hbm_to_vmem [thread:$0]  %s20, 256, %s22, [#allocation4], 128, 128, 8
    $region5: #{tpu_custom_call.1} parent=1 // pred_fallthru
      _
    // Predicated region
    $region6: #{tpu_custom_call.1} parent=1 // pred_check
      _
    $region7: #{tpu_custom_call.1} parent=1 // pred_check_branch
      %29 = sbr.rel (0) target = $region9
    $region8: #{tpu_custom_call.1} parent=1 // pred_region
      %s30 = sadd.s32 0, 0
      %p31 = scmp.lt.s32.totalorder %s30, 0
      %s32 = scalar_select %p31, %s30, 0
      %s33 = smul.u32 2, %s32
      %s35 = ssub.s32 256, 256
      %36 = vsyncadd [#allocation7], %s35
      %s37 = smul.addr %s33, 128
      %s38 = scalar_lea.hbm %s1, %s37
      %s39 = sshll.u32 [#allocation6], 4
      %s40 = int_to_ptr.vmem [resolvable:$true] %s39
      %45 = dma.hbm_to_vmem [thread:$0]  %s38, 256, %s40, [#allocation7], 128, 128, 8
    $region9: #{tpu_custom_call.1} parent=1 // pred_fallthru
      _
    // Predicated region
    $region10: #{tpu_custom_call.1} parent=1 // pred_check
      _
    $region11: #{tpu_custom_call.1} parent=1 // pred_check_branch
      %47 = sbr.rel (0) target = $region13
    $region12: #{tpu_custom_call.1} parent=1 // pred_region
      %48 = dma.done [#allocation4], 256
    $region13: #{tpu_custom_call.1} parent=1 // pred_fallthru
      _
    // Predicated region
    $region14: #{tpu_custom_call.1} parent=1 // pred_check
      _
    $region15: #{tpu_custom_call.1} parent=1 // pred_check_branch
      %50 = sbr.rel (0) target = $region17
    $region16: #{tpu_custom_call.1} parent=1 // pred_region
      %51 = dma.done [#allocation7], 256
    $region17: #{tpu_custom_call.1} parent=1 // pred_fallthru
      _
    %s52 = sadd.s32 0, 0
    %p53 = scmp.lt.s32.totalorder %s52, 0
    %s54 = scalar_select %p53, %s52, 0
    %s55 = smul.u32 2, %s54
    %s56 = sadd.s32 0, 0
    %p57 = scmp.lt.s32.totalorder %s56, 0
    %s58 = scalar_select %p57, %s56, 0
    %s59 = smul.u32 2, %s58
    %p60 = scmp.eq.s32.totalorder 0, 0
    // Predicated region
    $region18: #{tpu_custom_call.1} parent=1 // pred_check
      %p61 = pneg %p60
    $region19: #{tpu_custom_call.1} parent=1 // pred_check_branch
      %63 = sbr.rel (%p61) target = $region21
    $region20: #{tpu_custom_call.1} parent=1 // pred_region
      %64 = vst [vmem:[#allocation2] sm:$0xff] 0.0
    $region21: #{tpu_custom_call.1} parent=1 // pred_fallthru
      _
    %v65 = vld [vmem:[#allocation3] sm:$0xff]
    %v66 = vld [vmem:[#allocation3 + $0x8] sm:$0xff]
    %v67 = vld [vmem:[#allocation6] sm:$0xff]
    %v68 = vld [vmem:[#allocation6 + $0x8] sm:$0xff]
    %v69 = vsub.f32 %v65, %v67
    %v70 = vsub.f32 %v66, %v68
    %v71 = vadd.f32 %v67, 0.0
    %v72 = vadd.f32 %v68, 0.0
    %v73 = vrcp.pop %v71
    %v74 = vmul.f32 %v69, %v73
    %v75 = vrcp.pop %v72
    %v76 = vmul.f32 %v70, %v75
    %v77 = vmul.f32 %v74, %v74
    %v78 = vmul.f32 %v76, %v76
    %v79 = vld [vmem:[#allocation2] sm:$0xff]
    %v80 = vadd.f32 %v77, %v78
    %v81 = vadd.f32 %v79, %v80
    %82 = vst [vmem:[#allocation2] sm:$0xff] %v81
    // Predicated region
    $region22: #{tpu_custom_call.1} parent=1 // pred_check
      %p83 = pneg %p60
    $region23: #{tpu_custom_call.1} parent=1 // pred_check_branch
      %85 = sbr.rel (%p83) target = $region25
    $region24: #{tpu_custom_call.1} parent=1 // pred_region
      %v86 = vld [vmem:[#allocation2] sm:$0xff]
      %v87 = vrot.slane %v86, 4
      %v88 = vadd.f32 %v86, %v87
      %v89 = vrot.slane %v88, 2
      %v90 = vadd.f32 %v88, %v89
      %v91 = vrot.slane %v90, 1
      %v92 = vadd.f32 %v90, %v91
      %93 = vst [vmem:[#allocation8] sm:$0x1] %v92
    $region25: #{tpu_custom_call.1} parent=1 // pred_fallthru
      _
    // Predicated region
    $region26: #{tpu_custom_call.1} parent=1 // pred_check
      _
    $region27: #{tpu_custom_call.1} parent=1 // pred_check_branch
      %95 = sbr.rel (0) target = $region29
    $region28: #{tpu_custom_call.1} parent=1 // pred_region
      %s97 = ssub.s32 16, 16
      %98 = vsyncadd [#allocation5], %s97
      %s100 = sshll.u32 [#allocation8], 4
      %s101 = int_to_ptr.vmem [resolvable:$true] %s100
      %103 = dma.vmem_to_hbm [thread:$0]  %s101, 16, %s2, [#allocation5]
    $region29: #{tpu_custom_call.1} parent=1 // pred_fallthru
      _
    // Predicated region
    $region30: #{tpu_custom_call.1} parent=1 // pred_check
      _
    $region31: #{tpu_custom_call.1} parent=1 // pred_check_branch
      %105 = sbr.rel (0) target = $region33
    $region32: #{tpu_custom_call.1} parent=1 // pred_region
      %106 = dma.done [#allocation5], 16
    $region33: #{tpu_custom_call.1} parent=1 // pred_fallthru
      _
    %107 = vsyncpa [#allocation4], 1
    %108 = vsyncpa [#allocation7], 1
    %109 = vsyncpa [#allocation5], 1

</llo_original>
